<compile_context>
chip_gen: v6e
topology: v6e:2x2x1
jax: 0.10.0
libtpu: 0.0.40
codegen_flags: <defaults>
</compile_context>

<pallas_src>
import functools

import jax
import jax.numpy as jnp
from jax import lax
from jax.experimental import pallas as pl
from jax.experimental.pallas import tpu as pltpu


def _round_up(x, m):
    return ((x + m - 1) // m) * m


def _pad2(x, rows, cols):
    """Zero-pad a 2-D array up to (rows, cols); no-op (no copy) if aligned."""
    pr, pc = rows - x.shape[0], cols - x.shape[1]
    if pr == 0 and pc == 0:
        return x
    return jnp.pad(x, ((0, pr), (0, pc)))


def _vmem_limit(buffer_bytes):
    """Scoped-VMEM limit derived from actual tile footprint, with headroom."""
    return int(min(max(2 * buffer_bytes, 16 * 1024 * 1024), 64 * 1024 * 1024))


# --------------------------------------------------------------------------- #
# Kernels
# --------------------------------------------------------------------------- #
def _proj_kernel(x_ref, w_ref, out_ref, acc_ref):
    """out = x @ w^T, contraction (hidden) streamed over grid axis 2."""

    @pl.when(pl.program_id(2) == 0)
    def _():
        acc_ref[...] = jnp.zeros_like(acc_ref)

    # Cast to bf16 in-kernel (full-rate MXU); accumulate in f32.
    acc_ref[...] += lax.dot_general(
        x_ref[...].astype(jnp.bfloat16),
        w_ref[...].astype(jnp.bfloat16),
        dimension_numbers=(((1,), (1,)), ((), ())),
        preferred_element_type=jnp.float32,
    )

    @pl.when(pl.program_id(2) == pl.num_programs(2) - 1)
    def _():
        out_ref[...] = acc_ref[...].astype(out_ref.dtype)


def _attn_kernel(q_ref, k_ref, out_ref, acc_ref, *, inv_scalar):
    """out = tanh((q @ k^T) * inv_scalar), proj dim streamed over grid axis 2."""

    @pl.when(pl.program_id(2) == 0)
    def _():
        acc_ref[...] = jnp.zeros_like(acc_ref)

    acc_ref[...] += lax.dot_general(
        q_ref[...],
        k_ref[...],
        dimension_numbers=(((1,), (1,)), ((), ())),
        preferred_element_type=jnp.float32,
    )

    @pl.when(pl.program_id(2) == pl.num_programs(2) - 1)
    def _():
        # Scale on VPU, tanh on EUP (free slot next to MXU / store path).
        out_ref[...] = jnp.tanh(acc_ref[...] * inv_scalar).astype(out_ref.dtype)


# --------------------------------------------------------------------------- #
# Wrappers
# --------------------------------------------------------------------------- #
def _linear_proj(x, w, *, tile_m, tile_p, tile_h):
    """x: (M, H) @ w: (P, H) -> bf16 (M, P).  All dims multiples of tiles."""
    m, h = x.shape
    p, _ = w.shape

    in_bytes = x.dtype.itemsize
    w_bytes = w.dtype.itemsize
    buf_bytes = (
        2 * tile_m * tile_h * in_bytes      # x tile, double-buffered
        + 2 * tile_p * tile_h * w_bytes     # w tile, double-buffered
        + 2 * tile_m * tile_p * 2           # bf16 out tile, double-buffered
        + tile_m * tile_p * 4               # f32 accumulator
    )
    cost = pl.CostEstimate(
        flops=2 * m * p * h,
        transcendentals=0,
        bytes_accessed=m * h * in_bytes + p * h * w_bytes + m * p * 2,
    )
    return pl.pallas_call(
        _proj_kernel,
        out_shape=jax.ShapeDtypeStruct((m, p), jnp.bfloat16),
        grid_spec=pltpu.PrefetchScalarGridSpec(
            num_scalar_prefetch=0,
            grid=(m // tile_m, p // tile_p, h // tile_h),
            in_specs=[
                pl.BlockSpec((tile_m, tile_h), lambda i, j, k: (i, k)),
                pl.BlockSpec((tile_p, tile_h), lambda i, j, k: (j, k)),
            ],
            out_specs=pl.BlockSpec((tile_m, tile_p), lambda i, j, k: (i, j)),
            scratch_shapes=[pltpu.VMEM((tile_m, tile_p), jnp.float32)],
        ),
        compiler_params=pltpu.CompilerParams(
            dimension_semantics=("parallel", "parallel", "arbitrary"),
            vmem_limit_bytes=_vmem_limit(buf_bytes),
        ),
        cost_estimate=cost,
    )(x, w)


def attention_matrix(data_q, data_k, w_q, w_k, *, scale=True, tm=512, tn=512):
    """Pallas equivalent of AttentionMatrix.forward."""
    n_emb, hidden = data_q.shape
    n_feat, hidden_k = data_k.shape
    proj_dim = w_q.shape[0]
    assert hidden == hidden_k
    assert w_q.shape == (proj_dim, hidden)
    assert w_k.shape == (proj_dim, hidden)

    inv_scalar = 1.0 / (float(proj_dim) ** 0.5) if scale else 1.0

    # --- tile selection ---------------------------------------------------- #
    # bf16 sublane packing -> M tiles multiples of 16; lane dims multiples of 128.
    tile_m = min(tm, _round_up(n_emb, 16))
    tile_n = min(tn, _round_up(n_feat, 128))
    tile_p = min(512, _round_up(proj_dim, 128))
    tile_h = min(512, _round_up(hidden, 128))

    m_pad = _round_up(n_emb, tile_m)
    n_pad = _round_up(n_feat, tile_n)
    p_pad = _round_up(proj_dim, tile_p)
    h_pad = _round_up(hidden, tile_h)

    # v7x megacore: avoid a (1, 1) spatial grid when we can split an axis.
    if m_pad // tile_m == 1 and n_pad // tile_n == 1:
        if tile_n % 256 == 0:
            tile_n //= 2
        elif tile_m % 32 == 0:
            tile_m //= 2

    # --- pad only when needed (zero padding is numerically exact) ---------- #
    q_in = _pad2(data_q, m_pad, h_pad)
    k_in = _pad2(data_k, n_pad, h_pad)
    wq_p = _pad2(w_q, p_pad, h_pad)
    wk_p = _pad2(w_k, p_pad, h_pad)

    # --- projections: each computed exactly once, stored as bf16 ----------- #
    q_proj = _linear_proj(q_in, wq_p, tile_m=tile_m, tile_p=tile_p, tile_h=tile_h)
    k_proj = _linear_proj(k_in, wk_p, tile_m=tile_n, tile_p=tile_p, tile_h=tile_h)

    # --- attention: tanh((q @ k^T) / sqrt(proj_dim)) ----------------------- #
    # TODO(synk): emit bf16 output here if downstream tolerates it (halves the
    # dominant HBM write); kept f32 to match the module's output precision.
    buf_bytes = (
        2 * tile_m * tile_p * 2      # q tile (bf16), double-buffered
        + 2 * tile_n * tile_p * 2    # k tile (bf16), double-buffered
        + 2 * tile_m * tile_n * 4    # f32 out tile, double-buffered
        + tile_m * tile_n * 4        # f32 accumulator
    )
    cost = pl.CostEstimate(
        flops=2 * m_pad * n_pad * p_pad,
        transcendentals=m_pad * n_pad,
        bytes_accessed=m_pad * p_pad * 2 + n_pad * p_pad * 2 + m_pad * n_pad * 4,
    )
    kernel = functools.partial(_attn_kernel, inv_scalar=inv_scalar)
    out_pad = pl.pallas_call(
        kernel,
        out_shape=jax.ShapeDtypeStruct((m_pad, n_pad), jnp.float32),
        grid_spec=pltpu.PrefetchScalarGridSpec(
            num_scalar_prefetch=0,
            grid=(m_pad // tile_m, n_pad // tile_n, p_pad // tile_p),
            in_specs=[
                pl.BlockSpec((tile_m, tile_p), lambda i, j, k: (i, k)),
                pl.BlockSpec((tile_n, tile_p), lambda i, j, k: (j, k)),
            ],
            out_specs=pl.BlockSpec((tile_m, tile_n), lambda i, j, k: (i, j)),
            scratch_shapes=[pltpu.VMEM((tile_m, tile_n), jnp.float32)],
        ),
        compiler_params=pltpu.CompilerParams(
            dimension_semantics=("parallel", "parallel", "arbitrary"),
            vmem_limit_bytes=_vmem_limit(buf_bytes),
        ),
        cost_estimate=cost,
    )(q_proj, k_proj)

    if m_pad == n_emb and n_pad == n_feat:
        return out_pad
    return out_pad[:n_emb, :n_feat]


def attention_matrix_ref(data_q, data_k, w_q, w_k, *, scale=True):
    """Pure-JAX f32 reference for correctness checking."""
    proj_dim = w_q.shape[0]
    scalar = jnp.sqrt(jnp.float32(proj_dim)) if scale else jnp.float32(1.0)
    q = data_q @ w_q.T
    k = data_k @ w_k.T
    return jnp.tanh((q @ k.T) / scalar)


if __name__ == "__main__":
    # Small shapes consistent with the module's forward signature.
    n_embeddings = 8
    n_features = 16
    hidden_size = 32
    proj_dim = 16

    key = jax.random.PRNGKey(0)
    k0, k1, k2, k3 = jax.random.split(key, 4)

    data_q = jax.random.normal(k0, (n_embeddings, hidden_size), dtype=jnp.float32)
    data_k = jax.random.normal(k1, (n_features, hidden_size), dtype=jnp.float32)

    # Deterministic parameter init mimicking nn.Linear's uniform(-1/sqrt(fan_in), +):
    bound = 1.0 / (hidden_size ** 0.5)
    w_q = jax.random.uniform(
        k2, (proj_dim, hidden_size), minval=-bound, maxval=bound, dtype=jnp.float32
    )
    w_k = jax.random.uniform(
        k3, (proj_dim, hidden_size), minval=-bound, maxval=bound, dtype=jnp.float32
    )

    out = attention_matrix(data_q, data_k, w_q, w_k, scale=True)
    out = jax.block_until_ready(out)

    ref = attention_matrix_ref(data_q, data_k, w_q, w_k, scale=True)
    assert out.shape == (n_embeddings, n_features)
    # bf16 MXU inputs / bf16 q_proj,k_proj intermediates -> relaxed tolerance.
    assert jnp.allclose(out, ref, atol=3e-2, rtol=3e-2), "mismatch vs reference"

    print("KERNEL_OK")
</pallas_src>

<mosaic_0001>
module attributes {stable_mosaic.version = 11 : i64} {
  func.func @_proj_kernel(%arg0: i32, %arg1: i32, %arg2: i32, %arg3: memref<16x128xf32, #tpu.memory_space<vmem>>, %arg4: memref<128x128xf32, #tpu.memory_space<vmem>>, %arg5: memref<16x128xbf16, #tpu.memory_space<vmem>>, %arg6: memref<16x128xf32, #tpu.memory_space<vmem>>) attributes {dimension_semantics = [#tpu.dimension_semantics<parallel>, #tpu.dimension_semantics<parallel>, #tpu.dimension_semantics<arbitrary>], iteration_bounds = array<i64: 1, 1, 1>, scalar_prefetch = 0 : i64, scratch_operands = 1 : i64, tpu.core_type = #tpu.core_type<tc>, window_params = [{transform_indices = @transform_0, window_bounds = array<i64: 16, 128>}, {transform_indices = @transform_1, window_bounds = array<i64: 128, 128>}, {transform_indices = @transform_2, window_bounds = array<i64: 16, 128>}]} {
    %c0_i32 = arith.constant 0 : i32
    %0 = arith.cmpi eq, %arg2, %c0_i32 : i32
    %1 = arith.extui %0 : i1 to i32
    %c0_i32_0 = arith.constant 0 : i32
    %2 = arith.cmpi ne, %1, %c0_i32_0 : i32
    scf.if %2 {
      %cst_10 = arith.constant 0.000000e+00 : f32
      %14 = vector.broadcast %cst_10 : f32 to vector<16x128xf32>
      %c0_11 = arith.constant 0 : index
      %c0_12 = arith.constant 0 : index
      %15 = vector.load %arg6[%c0_11, %c0_12] : memref<16x128xf32, #tpu.memory_space<vmem>>, vector<16x128xf32>
      tpu.vector_store %arg6[%c0_11, %c0_12], %14 {strides = array<i32>} : memref<16x128xf32, #tpu.memory_space<vmem>>, vector<16x128xf32>,
    } else {
    }
    %c0 = arith.constant 0 : index
    %c0_1 = arith.constant 0 : index
    %3 = vector.load %arg6[%c0, %c0_1] : memref<16x128xf32, #tpu.memory_space<vmem>>, vector<16x128xf32>
    %c0_2 = arith.constant 0 : index
    %c0_3 = arith.constant 0 : index
    %4 = vector.load %arg3[%c0_2, %c0_3] : memref<16x128xf32, #tpu.memory_space<vmem>>, vector<16x128xf32>
    %5 = arith.truncf %4 : vector<16x128xf32> to vector<16x128xbf16>
    %c0_4 = arith.constant 0 : index
    %c0_5 = arith.constant 0 : index
    %6 = vector.load %arg4[%c0_4, %c0_5] : memref<128x128xf32, #tpu.memory_space<vmem>>, vector<128x128xf32>
    %7 = arith.truncf %6 : vector<128x128xf32> to vector<128x128xbf16>
    %cst = arith.constant dense<0.000000e+00> : vector<16x128xf32>
    %8 = tpu.matmul %5, %7, %cst {dimension_numbers = #tpu.dot_dimension_numbers<[1], [1], [0], [0], [0, 0, 1, 0], [], []>} : vector<16x128xbf16>, vector<128x128xbf16>, vector<16x128xf32> -> vector<16x128xf32>
    %9 = arith.addf %3, %8 : vector<16x128xf32>
    %c0_6 = arith.constant 0 : index
    %c0_7 = arith.constant 0 : index
    %10 = vector.load %arg6[%c0_6, %c0_7] : memref<16x128xf32, #tpu.memory_space<vmem>>, vector<16x128xf32>
    tpu.vector_store %arg6[%c0_6, %c0_7], %9 {strides = array<i32>} : memref<16x128xf32, #tpu.memory_space<vmem>>, vector<16x128xf32>,
    %c0_i32_8 = arith.constant 0 : i32
    %11 = arith.cmpi eq, %arg2, %c0_i32_8 : i32
    %12 = arith.extui %11 : i1 to i32
    %c0_i32_9 = arith.constant 0 : i32
    %13 = arith.cmpi ne, %12, %c0_i32_9 : i32
    scf.if %13 {
      %c0_10 = arith.constant 0 : index
      %c0_11 = arith.constant 0 : index
      %14 = vector.load %arg6[%c0_10, %c0_11] : memref<16x128xf32, #tpu.memory_space<vmem>>, vector<16x128xf32>
      %15 = arith.truncf %14 : vector<16x128xf32> to vector<16x128xbf16>
      %c0_12 = arith.constant 0 : index
      %c0_13 = arith.constant 0 : index
      %16 = vector.load %arg5[%c0_12, %c0_13] : memref<16x128xbf16, #tpu.memory_space<vmem>>, vector<16x128xbf16>
      tpu.vector_store %arg5[%c0_12, %c0_13], %15 {strides = array<i32>} : memref<16x128xbf16, #tpu.memory_space<vmem>>, vector<16x128xbf16>,
    } else {
    }
    return
  }
  func.func @transform_0(%arg0: i32, %arg1: i32, %arg2: i32) -> (i32, i32) {
    %c0_i32 = arith.constant 0 : i32
    return %arg0, %arg2 : i32, i32
  }
  func.func @transform_1(%arg0: i32, %arg1: i32, %arg2: i32) -> (i32, i32) {
    %c0_i32 = arith.constant 0 : i32
    return %arg1, %arg2 : i32, i32
  }
  func.func @transform_2(%arg0: i32, %arg1: i32, %arg2: i32) -> (i32, i32) {
    %c0_i32 = arith.constant 0 : i32
    return %arg0, %arg1 : i32, i32
  }
}

</mosaic_0001>

<llo_original>
// kernel: tpu_custom_call.1
$region0: #{tpu_custom_call.1}
  #allocation0 [shape = 'u32[]', space=smem, size = 0x4, offset = 0x4, fixed_abs, tag = 'smem constant byte address 0x4 - core index']
  #allocation1 [shape = 'u32[144,128]{1,0:T(1,128)}', space=vmem, size = 0x12000, scoped, tag = 'internal scratch']
  #allocation2 [shape = 'f32[16,128]{1,0:T(8,128)}', space=vmem, size = 0x2000, scoped, tag = 'scratch operand']
  %s0 = inlined_call_operand.hbm [shape: f32[16,128], index: 0, kind: input, shape index: {}]
  %s1 = inlined_call_operand.hbm [shape: f32[128,128], index: 1, kind: input, shape index: {}]
  %s2 = inlined_call_operand.hbm [shape: bf16[16,128], index: 2, kind: output, shape index: {}]
  %s3 = sld [smem:[#allocation0]]
  $region34: #{tpu_custom_call.1} parent=0
    _
  %s5 = ssub.s32 1, %s3
  %s6 = scalar_select 0, %s5, %s3
  $region1: #{tpu_custom_call.1} parent=0
    #allocation3 [shape = 'u8[8192]{0}', space=vmem, size = 0x2000, scoped, tag = 'input window, operand 0, single buffered']
    #allocation4 [shape = 's32[1]{0}', space=sflag, size = 0x4, scoped, tag = 'scoped memory for tpu_custom_call.1']
    #allocation5 [shape = 's32[1]{0}', space=sflag, size = 0x4, scoped, tag = 'scoped memory for tpu_custom_call.1']
    #allocation6 [shape = 'u8[65536]{0}', space=vmem, size = 0x10000, scoped, tag = 'input window, operand 1, single buffered']
    #allocation7 [shape = 's32[1]{0}', space=sflag, size = 0x4, scoped, tag = 'scoped memory for tpu_custom_call.1']
    #allocation8 [shape = 'u8[4096]{0}', space=vmem, size = 0x1000, scoped, tag = 'output window, operand 0, single buffered']
    %7 = vsyncpa [#allocation4], 0
    %8 = vsyncpa [#allocation7], 0
    %9 = vsyncpa [#allocation5], 0
    // Predicated region
    $region2: #{tpu_custom_call.1} parent=1 // pred_check
      _
    $region3: #{tpu_custom_call.1} parent=1 // pred_check_branch
      %11 = sbr.rel (0) target = $region5
    $region4: #{tpu_custom_call.1} parent=1 // pred_region
      %s13 = ssub.s32 256, 256
      %14 = vsyncadd [#allocation4], %s13
      %s15 = sshll.u32 [#allocation3], 4
      %s16 = int_to_ptr.vmem [resolvable:$true] %s15
      %21 = dma.hbm_to_vmem [thread:$0]  %s0, 256, %s16, [#allocation4], 128, 128, 8
    $region5: #{tpu_custom_call.1} parent=1 // pred_fallthru
      _
    // Predicated region
    $region6: #{tpu_custom_call.1} parent=1 // pred_check
      _
    $region7: #{tpu_custom_call.1} parent=1 // pred_check_branch
      %23 = sbr.rel (0) target = $region9
    $region8: #{tpu_custom_call.1} parent=1 // pred_region
      %s25 = ssub.s32 2048, 2048
      %26 = vsyncadd [#allocation7], %s25
      %s27 = sshll.u32 [#allocation6], 4
      %s28 = int_to_ptr.vmem [resolvable:$true] %s27
      %33 = dma.hbm_to_vmem [thread:$0]  %s1, 2048, %s28, [#allocation7], 128, 128, 8
    $region9: #{tpu_custom_call.1} parent=1 // pred_fallthru
      _
    // Predicated region
    $region10: #{tpu_custom_call.1} parent=1 // pred_check
      _
    $region11: #{tpu_custom_call.1} parent=1 // pred_check_branch
      %35 = sbr.rel (0) target = $region13
    $region12: #{tpu_custom_call.1} parent=1 // pred_region
      %36 = dma.done [#allocation4], 256
    $region13: #{tpu_custom_call.1} parent=1 // pred_fallthru
      _
    // Predicated region
    $region14: #{tpu_custom_call.1} parent=1 // pred_check
      _
    $region15: #{tpu_custom_call.1} parent=1 // pred_check_branch
      %38 = sbr.rel (0) target = $region17
    $region16: #{tpu_custom_call.1} parent=1 // pred_region
      %39 = dma.done [#allocation7], 2048
    $region17: #{tpu_custom_call.1} parent=1 // pred_fallthru
      _
    %p41 = scmp.eq.s32.totalorder 0, 0
    // Predicated region
    $region18: #{tpu_custom_call.1} parent=1 // pred_check
      %p42 = pneg %p41
    $region19: #{tpu_custom_call.1} parent=1 // pred_check_branch
      %44 = sbr.rel (%p42) target = $region21
    $region20: #{tpu_custom_call.1} parent=1 // pred_region
      %45 = vst [vmem:[#allocation2] sm:$0xff] 0.0
      %46 = vst [vmem:[#allocation2 + $0x8] sm:$0xff] 0.0
    $region21: #{tpu_custom_call.1} parent=1 // pred_fallthru
      _
    %v47 = vld [vmem:[#allocation2] sm:$0xff]
    %v48 = vld [vmem:[#allocation2 + $0x8] sm:$0xff]
    %v49 = vld [vmem:[#allocation3] sm:$0xff]
    %v50 = vld [vmem:[#allocation3 + $0x8] sm:$0xff]
    %v51 = vpack.c.bf16 %v50, %v49
    %v52 = vld [vmem:[#allocation6] sm:$0xff]
    %v53 = vld [vmem:[#allocation6 + $0x8] sm:$0xff]
    %v54 = vld [vmem:[#allocation6 + $0x10] sm:$0xff]
    %v55 = vld [vmem:[#allocation6 + $0x18] sm:$0xff]
    %v56 = vld [vmem:[#allocation6 + $0x20] sm:$0xff]
    %v57 = vld [vmem:[#allocation6 + $0x28] sm:$0xff]
    %v58 = vld [vmem:[#allocation6 + $0x30] sm:$0xff]
    %v59 = vld [vmem:[#allocation6 + $0x38] sm:$0xff]
    %v60 = vld [vmem:[#allocation6 + $0x40] sm:$0xff]
    %v61 = vld [vmem:[#allocation6 + $0x48] sm:$0xff]
    %v62 = vld [vmem:[#allocation6 + $0x50] sm:$0xff]
    %v63 = vld [vmem:[#allocation6 + $0x58] sm:$0xff]
    %v64 = vld [vmem:[#allocation6 + $0x60] sm:$0xff]
    %v65 = vld [vmem:[#allocation6 + $0x68] sm:$0xff]
    %v66 = vld [vmem:[#allocation6 + $0x70] sm:$0xff]
    %v67 = vld [vmem:[#allocation6 + $0x78] sm:$0xff]
    %v68 = vpack.c.bf16 %v53, %v52
    %v69 = vpack.c.bf16 %v55, %v54
    %v70 = vpack.c.bf16 %v57, %v56
    %v71 = vpack.c.bf16 %v59, %v58
    %v72 = vpack.c.bf16 %v61, %v60
    %v73 = vpack.c.bf16 %v63, %v62
    %v74 = vpack.c.bf16 %v65, %v64
    %v75 = vpack.c.bf16 %v67, %v66
    %76 = vmatprep.subr.bf16.mxu0 0
    %77 = vmatpush1.bf16.xpose.msra.mxu0 %v75
    %78 = vmatprep.subr.bf16.mxu0 0
    %79 = vmatpush1.bf16.xpose.msra.mxu0 %v74
    %80 = vmatprep.subr.bf16.mxu0 0
    %81 = vmatpush1.bf16.xpose.msra.mxu0 %v73
    %82 = vmatprep.subr.bf16.mxu0 0
    %83 = vmatpush1.bf16.xpose.msra.mxu0 %v72
    %84 = vmatprep.subr.bf16.mxu0 0
    %85 = vmatpush1.bf16.xpose.msra.mxu0 %v71
    %86 = vmatprep.subr.bf16.mxu0 0
    %87 = vmatpush1.bf16.xpose.msra.mxu0 %v70
    %88 = vmatprep.subr.bf16.mxu0 0
    %89 = vmatpush1.bf16.xpose.msra.mxu0 %v69
    %90 = vmatprep.subr.bf16.mxu0 0
    %91 = vmatpush1.bf16.xpose.msra.mxu0 %v68
    %92 = vmatprep.subr.bf16.mxu0 0
    %93 = vmatpush2.bf16.xpose.msra.mxu0 0
    %94 = vmatprep.subr.bf16.mxu0 0
    %95 = vmatpush2.bf16.xpose.msra.mxu0 0
    %96 = vmatprep.subr.bf16.mxu0 0
    %97 = vmatpush2.bf16.xpose.msra.mxu0 0
    %98 = vmatprep.subr.bf16.mxu0 0
    %99 = vmatpush2.bf16.xpose.msra.mxu0 0
    %100 = vmatprep.subr.bf16.mxu0 0
    %101 = vmatpush2.bf16.xpose.msra.mxu0 0
    %102 = vmatprep.subr.bf16.mxu0 0
    %103 = vmatpush2.bf16.xpose.msra.mxu0 0
    %104 = vmatprep.subr.bf16.mxu0 0
    %105 = vmatpush2.bf16.xpose.msra.mxu0 0
    %106 = vmatprep.subr.bf16.mxu0 0
    %107 = vmatpush2.bf16.xpose.msra.mxu0 0
    %108 = vmatprep.mubr.bf16.mxu0 0
    %109 = vmatmul.mubr.bf16.gmra.mxu0 %v51
    %v110 = vpop.f32.mrf.mxu0
    %v111 = vadd.f32 0.0, %v110
    %v112 = vpop.f32.mrf.mxu0
    %v113 = vpop.f32.mrf.mxu0
    %v114 = vadd.f32 0.0, %v113
    %v115 = vpop.f32.mrf.mxu0
    %116 = vdwg.mxu0
    %v117 = vadd.f32 %v47, %v111
    %v118 = vadd.f32 %v48, %v114
    %119 = vst [vmem:[#allocation2] sm:$0xff] %v117
    %120 = vst [vmem:[#allocation2 + $0x8] sm:$0xff] %v118
    // Predicated region
    $region22: #{tpu_custom_call.1} parent=1 // pred_check
      %p121 = pneg %p41
    $region23: #{tpu_custom_call.1} parent=1 // pred_check_branch
      %123 = sbr.rel (%p121) target = $region25
    $region24: #{tpu_custom_call.1} parent=1 // pred_region
      %v124 = vld [vmem:[#allocation2] sm:$0xff]
      %v125 = vld [vmem:[#allocation2 + $0x8] sm:$0xff]
      %v126 = vpack.c.bf16 %v125, %v124
      %v128 = vunpack.c.l.b16 %v126
      %v129 = vunpack.c.h.b16 %v126
      %v130 = vpack.c.b16 %v128, %v128
      %v131 = vpack.c.b16 %v129, %v129
      %134 = vst [vmem:[#allocation8] sm:$0xf] %v130
      %135 = vst [vmem:[#allocation8 + $0x4] sm:$0xf] %v131
    $region25: #{tpu_custom_call.1} parent=1 // pred_fallthru
      _
    // Predicated region
    $region26: #{tpu_custom_call.1} parent=1 // pred_check
      _
    $region27: #{tpu_custom_call.1} parent=1 // pred_check_branch
      %137 = sbr.rel (0) target = $region29
    $region28: #{tpu_custom_call.1} parent=1 // pred_region
      %s139 = ssub.s32 128, 128
      %140 = vsyncadd [#allocation5], %s139
      %s141 = sshll.u32 [#allocation8], 4
      %s142 = int_to_ptr.vmem [resolvable:$true] %s141
      %147 = dma.vmem_to_hbm [thread:$0]  %s142, 128, %s2, [#allocation5], 64, 64, 4
    $region29: #{tpu_custom_call.1} parent=1 // pred_fallthru
      _
    // Predicated region
    $region30: #{tpu_custom_call.1} parent=1 // pred_check
      _
    $region31: #{tpu_custom_call.1} parent=1 // pred_check_branch
      %149 = sbr.rel (0) target = $region33
    $region32: #{tpu_custom_call.1} parent=1 // pred_region
      %150 = dma.done [#allocation5], 128
    $region33: #{tpu_custom_call.1} parent=1 // pred_fallthru
      _
    %151 = vsyncpa [#allocation4], 1
    %152 = vsyncpa [#allocation7], 1
    %153 = vsyncpa [#allocation5], 1

</llo_original>
